<compile_context>
chip_gen: v5e
topology: v5e:2x2
jax: 0.10.0
libtpu: 0.0.40
codegen_flags: <defaults>
</compile_context>

<pallas_src>
import functools

import jax
import jax.numpy as jnp
from jax.experimental import pallas as pl
from jax.experimental.pallas import tpu as pltpu


def _round_up(n, m):
    return ((n + m - 1) // m) * m


def _mlp_kernel(x_ref, w1_ref, b1_ref, w2_ref, b2_ref, w3_ref, b3_ref, o_ref):
    """Fused 3-layer MLP for one batch tile, entirely in VMEM.

    Weights arrive already in their MXU operand dtype (bf16 by default);
    accumulation and bias add are f32.
    """
    cdt = w1_ref.dtype  # MXU operand dtype (bf16 default, f32 optional)

    x = x_ref[...].astype(cdt)

    # Layer 1: Linear + ReLU (f32 accumulate, f32 bias).
    h1 = jnp.dot(x, w1_ref[...], preferred_element_type=jnp.float32)
    h1 = jnp.maximum(h1 + b1_ref[...], 0.0)

    # Layer 2: Linear + ReLU.
    h2 = jnp.dot(h1.astype(cdt), w2_ref[...], preferred_element_type=jnp.float32)
    h2 = jnp.maximum(h2 + b2_ref[...], 0.0)

    # Layer 3: Linear (no activation).
    out = jnp.dot(h2.astype(cdt), w3_ref[...], preferred_element_type=jnp.float32)
    out = out + b3_ref[...]

    o_ref[...] = out.astype(o_ref.dtype)


def init_controlnet_params(key, n_input, n_hidden, n_output, dtype=jnp.float32):
    """Mirror the PyTorch init: weight ~ N(0, 0.001), bias = 0.

    Weights are returned as [in, out] (transposed vs. nn.Linear storage).
    """
    k1, k2, k3 = jax.random.split(key, 3)
    std = 0.001
    w1 = (jax.random.normal(k1, (n_input, n_hidden), dtype) * std).astype(dtype)
    w2 = (jax.random.normal(k2, (n_hidden, n_hidden), dtype) * std).astype(dtype)
    w3 = (jax.random.normal(k3, (n_hidden, n_output), dtype) * std).astype(dtype)
    b1 = jnp.zeros((1, n_hidden), dtype)
    b2 = jnp.zeros((1, n_hidden), dtype)
    b3 = jnp.zeros((1, n_output), dtype)
    return w1, b1, w2, b2, w3, b3


def prepare_controlnet_params(params, use_bf16_matmul=True):
    """ONE-TIME parameter prep (call at init / param-load time, not per step).

    Pads the hidden dim to a multiple of 128 (exact: zero weight rows/cols,
    zero bias, ReLU(0)=0) and casts weights to the MXU operand dtype.
    Biases stay f32 (added to the f32 accumulator).
    """
    w1, b1, w2, b2, w3, b3 = params
    n_hidden = w1.shape[1]
    nh = _round_up(n_hidden, 128)
    pad_h = nh - n_hidden
    wdt = jnp.bfloat16 if use_bf16_matmul else jnp.float32

    w1p = jnp.pad(w1, ((0, 0), (0, pad_h))).astype(wdt)
    b1p = jnp.pad(b1, ((0, 0), (0, pad_h))).astype(jnp.float32)
    w2p = jnp.pad(w2, ((0, pad_h), (0, pad_h))).astype(wdt)
    b2p = jnp.pad(b2, ((0, 0), (0, pad_h))).astype(jnp.float32)
    w3p = jnp.pad(w3, ((0, pad_h), (0, 0))).astype(wdt)
    b3p = b3.astype(jnp.float32)
    return w1p, b1p, w2p, b2p, w3p, b3p


@functools.partial(jax.jit, static_argnames=("tile_b",))
def controlnet_forward(x, w1, b1, w2, b2, w3, b3, *, tile_b=1024):
    """Pallas-backed ControlNet.forward.

    x:  [B, n_input]              (f32)
    wK: already prepared via prepare_controlnet_params (hidden dim padded,
        bf16 or f32 operands); bK are f32.
    """
    B, n_input = x.shape
    nh = w1.shape[1]          # padded hidden dim (multiple of 128)
    n_output = w3.shape[1]

    # Batch tile: clamp to the batch, but keep >=2 grid steps whenever the
    # batch permits so the "parallel" batch axis shards across both
    # TensorCores on v7x.  Only the batch dim ever gets padded (cheap, and a
    # no-op when tb divides B).
    B8 = _round_up(B, 8)
    tb = min(tile_b, B8)
    if B8 >= 16:
        tb = min(tb, _round_up((B8 + 1) // 2, 8))
    tb = max(8, _round_up(tb, 8))
    Bp = _round_up(B, tb)

    xp = x if Bp == B else jnp.pad(x, ((0, Bp - B), (0, 0)))

    grid = (Bp // tb,)

    # Constant index_map -> weights/biases stay VMEM-resident across steps.
    resident = lambda shape: pl.BlockSpec(shape, lambda i: (0, 0))

    out = pl.pallas_call(
        _mlp_kernel,
        out_shape=jax.ShapeDtypeStruct((Bp, n_output), x.dtype),
        grid_spec=pltpu.PrefetchScalarGridSpec(
            num_scalar_prefetch=0,
            grid=grid,
            in_specs=[
                pl.BlockSpec((tb, n_input), lambda i: (i, 0)),  # x tile (unpadded lanes)
                resident((n_input, nh)),   # w1
                resident((1, nh)),         # b1
                resident((nh, nh)),        # w2
                resident((1, nh)),         # b2
                resident((nh, n_output)),  # w3
                resident((1, n_output)),   # b3
            ],
            out_specs=pl.BlockSpec((tb, n_output), lambda i: (i, 0)),
        ),
        compiler_params=pltpu.CompilerParams(
            dimension_semantics=("parallel",),
        ),
    )(xp, w1, b1, w2, b2, w3, b3)

    return out if Bp == B else out[:B]


def controlnet_reference(x, w1, b1, w2, b2, w3, b3):
    """Pure-JAX reference (un-prepared f32 params) for correctness checking."""
    h1 = jnp.maximum(x @ w1 + b1, 0.0)
    h2 = jnp.maximum(h1 @ w2 + b2, 0.0)
    return h2 @ w3 + b3


if __name__ == "__main__":
    # Small shapes implied by the module: flat feature vectors in, flat out.
    B, n_input, n_hidden, n_output = 16, 32, 64, 16

    key = jax.random.PRNGKey(0)
    kx, kp = jax.random.split(key)
    x = jax.random.normal(kx, (B, n_input), jnp.float32)
    raw_params = init_controlnet_params(kp, n_input, n_hidden, n_output)

    ref = controlnet_reference(x, *raw_params)

    # Default fast path: bf16 MXU operands (prepared once, reused every call).
    params_bf16 = prepare_controlnet_params(raw_params, use_bf16_matmul=True)
    out = jax.block_until_ready(controlnet_forward(x, *params_bf16))
    assert out.shape == (B, n_output), out.shape
    assert jnp.allclose(out, ref, atol=1e-5, rtol=5e-2), "bf16 mismatch vs reference"

    # f32 MXU operands (tight-parity path).
    params_f32 = prepare_controlnet_params(raw_params, use_bf16_matmul=False)
    out_f32 = jax.block_until_ready(controlnet_forward(x, *params_f32))
    assert out_f32.shape == (B, n_output), out_f32.shape
    assert jnp.allclose(out_f32, ref, atol=1e-5, rtol=1e-5), "f32 mismatch vs reference"

    print("KERNEL_OK")
</pallas_src>

<mosaic_0001>
module attributes {stable_mosaic.version = 11 : i64} {
  func.func @_mlp_kernel(%arg0: i32, %arg1: memref<8x32xf32, #tpu.memory_space<vmem>>, %arg2: memref<32x128xbf16, #tpu.memory_space<vmem>>, %arg3: memref<1x128xf32, #tpu.memory_space<vmem>>, %arg4: memref<128x128xbf16, #tpu.memory_space<vmem>>, %arg5: memref<1x128xf32, #tpu.memory_space<vmem>>, %arg6: memref<128x16xbf16, #tpu.memory_space<vmem>>, %arg7: memref<1x16xf32, #tpu.memory_space<vmem>>, %arg8: memref<8x16xf32, #tpu.memory_space<vmem>>) attributes {dimension_semantics = [#tpu.dimension_semantics<parallel>], iteration_bounds = array<i64: 2>, scalar_prefetch = 0 : i64, scratch_operands = 0 : i64, tpu.core_type = #tpu.core_type<tc>, window_params = [{transform_indices = @transform_0, window_bounds = array<i64: 8, 32>}, {pipeline_mode = #tpu.pipeline_mode<synchronous>, transform_indices = @transform_1, window_bounds = array<i64: 32, 128>}, {pipeline_mode = #tpu.pipeline_mode<synchronous>, transform_indices = @transform_2, window_bounds = array<i64: 1, 128>}, {pipeline_mode = #tpu.pipeline_mode<synchronous>, transform_indices = @transform_3, window_bounds = array<i64: 128, 128>}, {pipeline_mode = #tpu.pipeline_mode<synchronous>, transform_indices = @transform_4, window_bounds = array<i64: 1, 128>}, {pipeline_mode = #tpu.pipeline_mode<synchronous>, transform_indices = @transform_5, window_bounds = array<i64: 128, 16>}, {pipeline_mode = #tpu.pipeline_mode<synchronous>, transform_indices = @transform_6, window_bounds = array<i64: 1, 16>}, {transform_indices = @transform_7, window_bounds = array<i64: 8, 16>}]} {
    %c0 = arith.constant 0 : index
    %c0_0 = arith.constant 0 : index
    %0 = vector.load %arg1[%c0, %c0_0] : memref<8x32xf32, #tpu.memory_space<vmem>>, vector<8x32xf32>
    %1 = arith.truncf %0 : vector<8x32xf32> to vector<8x32xbf16>
    %c0_1 = arith.constant 0 : index
    %c0_2 = arith.constant 0 : index
    %2 = vector.load %arg2[%c0_1, %c0_2] : memref<32x128xbf16, #tpu.memory_space<vmem>>, vector<32x128xbf16>
    %cst = arith.constant dense<0.000000e+00> : vector<8x128xf32>
    %3 = tpu.matmul %1, %2, %cst {dimension_numbers = #tpu.dot_dimension_numbers<[1], [0], [0], [1], [0, 0, 1, 1], [], []>} : vector<8x32xbf16>, vector<32x128xbf16>, vector<8x128xf32> -> vector<8x128xf32>
    %c0_3 = arith.constant 0 : index
    %c0_4 = arith.constant 0 : index
    %4 = vector.load %arg3[%c0_3, %c0_4] : memref<1x128xf32, #tpu.memory_space<vmem>>, vector<1x128xf32>
    %5 = vector.broadcast %4 : vector<1x128xf32> to vector<8x128xf32>
    %6 = arith.addf %3, %5 : vector<8x128xf32>
    %cst_5 = arith.constant 0.000000e+00 : f32
    %7 = vector.broadcast %cst_5 : f32 to vector<8x128xf32>
    %8 = arith.maximumf %6, %7 : vector<8x128xf32>
    %9 = arith.truncf %8 : vector<8x128xf32> to vector<8x128xbf16>
    %c0_6 = arith.constant 0 : index
    %c0_7 = arith.constant 0 : index
    %10 = vector.load %arg4[%c0_6, %c0_7] : memref<128x128xbf16, #tpu.memory_space<vmem>>, vector<128x128xbf16>
    %cst_8 = arith.constant dense<0.000000e+00> : vector<8x128xf32>
    %11 = tpu.matmul %9, %10, %cst_8 {dimension_numbers = #tpu.dot_dimension_numbers<[1], [0], [0], [1], [0, 0, 1, 1], [], []>} : vector<8x128xbf16>, vector<128x128xbf16>, vector<8x128xf32> -> vector<8x128xf32>
    %c0_9 = arith.constant 0 : index
    %c0_10 = arith.constant 0 : index
    %12 = vector.load %arg5[%c0_9, %c0_10] : memref<1x128xf32, #tpu.memory_space<vmem>>, vector<1x128xf32>
    %13 = vector.broadcast %12 : vector<1x128xf32> to vector<8x128xf32>
    %14 = arith.addf %11, %13 : vector<8x128xf32>
    %cst_11 = arith.constant 0.000000e+00 : f32
    %15 = vector.broadcast %cst_11 : f32 to vector<8x128xf32>
    %16 = arith.maximumf %14, %15 : vector<8x128xf32>
    %17 = arith.truncf %16 : vector<8x128xf32> to vector<8x128xbf16>
    %c0_12 = arith.constant 0 : index
    %c0_13 = arith.constant 0 : index
    %18 = vector.load %arg6[%c0_12, %c0_13] : memref<128x16xbf16, #tpu.memory_space<vmem>>, vector<128x16xbf16>
    %cst_14 = arith.constant dense<0.000000e+00> : vector<8x16xf32>
    %19 = tpu.matmul %17, %18, %cst_14 {dimension_numbers = #tpu.dot_dimension_numbers<[1], [0], [0], [1], [0, 0, 1, 1], [], []>} : vector<8x128xbf16>, vector<128x16xbf16>, vector<8x16xf32> -> vector<8x16xf32>
    %c0_15 = arith.constant 0 : index
    %c0_16 = arith.constant 0 : index
    %20 = vector.load %arg7[%c0_15, %c0_16] : memref<1x16xf32, #tpu.memory_space<vmem>>, vector<1x16xf32>
    %21 = vector.broadcast %20 : vector<1x16xf32> to vector<8x16xf32>
    %22 = arith.addf %19, %21 : vector<8x16xf32>
    %c0_17 = arith.constant 0 : index
    %c0_18 = arith.constant 0 : index
    %23 = vector.load %arg8[%c0_17, %c0_18] : memref<8x16xf32, #tpu.memory_space<vmem>>, vector<8x16xf32>
    tpu.vector_store %arg8[%c0_17, %c0_18], %22 {strides = array<i32>} : memref<8x16xf32, #tpu.memory_space<vmem>>, vector<8x16xf32>,
    return
  }
  func.func @transform_0(%arg0: i32) -> (i32, i32) {
    %c0_i32 = arith.constant 0 : i32
    %c0_i32_0 = arith.constant 0 : i32
    return %arg0, %c0_i32 : i32, i32
  }
  func.func @transform_1(%arg0: i32) -> (i32, i32) {
    %c0_i32 = arith.constant 0 : i32
    %c0_i32_0 = arith.constant 0 : i32
    %c0_i32_1 = arith.constant 0 : i32
    return %c0_i32, %c0_i32_0 : i32, i32
  }
  func.func @transform_2(%arg0: i32) -> (i32, i32) {
    %c0_i32 = arith.constant 0 : i32
    %c0_i32_0 = arith.constant 0 : i32
    %c0_i32_1 = arith.constant 0 : i32
    return %c0_i32, %c0_i32_0 : i32, i32
  }
  func.func @transform_3(%arg0: i32) -> (i32, i32) {
    %c0_i32 = arith.constant 0 : i32
    %c0_i32_0 = arith.constant 0 : i32
    %c0_i32_1 = arith.constant 0 : i32
    return %c0_i32, %c0_i32_0 : i32, i32
  }
  func.func @transform_4(%arg0: i32) -> (i32, i32) {
    %c0_i32 = arith.constant 0 : i32
    %c0_i32_0 = arith.constant 0 : i32
    %c0_i32_1 = arith.constant 0 : i32
    return %c0_i32, %c0_i32_0 : i32, i32
  }
  func.func @transform_5(%arg0: i32) -> (i32, i32) {
    %c0_i32 = arith.constant 0 : i32
    %c0_i32_0 = arith.constant 0 : i32
    %c0_i32_1 = arith.constant 0 : i32
    return %c0_i32, %c0_i32_0 : i32, i32
  }
  func.func @transform_6(%arg0: i32) -> (i32, i32) {
    %c0_i32 = arith.constant 0 : i32
    %c0_i32_0 = arith.constant 0 : i32
    %c0_i32_1 = arith.constant 0 : i32
    return %c0_i32, %c0_i32_0 : i32, i32
  }
  func.func @transform_7(%arg0: i32) -> (i32, i32) {
    %c0_i32 = arith.constant 0 : i32
    %c0_i32_0 = arith.constant 0 : i32
    return %arg0, %c0_i32 : i32, i32
  }
}

</mosaic_0001>

<llo_original>
// kernel: controlnet_forward.1
$region0: #{controlnet_forward.1}
  #allocation0 [shape = 'u32[]', space=smem, size = 0x4, offset = 0x4, fixed_abs, tag = 'smem constant byte address 0x4 - core index']
  #allocation1 [shape = 'u32[72,128]{1,0:T(1,128)}', space=vmem, size = 0x9000, scoped, tag = 'internal scratch']
  %s0 = inlined_call_operand.hbm [shape: f32[16,32], index: 0, kind: input, shape index: {}]
  %s1 = inlined_call_operand.hbm [shape: bf16[32,128], index: 1, kind: input, shape index: {}]
  %s2 = inlined_call_operand.vmem [shape: f32[1,128], index: 2, kind: input, shape index: {}]
  %s3 = inlined_call_operand.vmem [shape: bf16[128,128], index: 3, kind: input, shape index: {}]
  %s4 = inlined_call_operand.vmem [shape: f32[1,128], index: 4, kind: input, shape index: {}]
  %s5 = inlined_call_operand.vmem [shape: bf16[128,16], index: 5, kind: input, shape index: {}]
  %s6 = inlined_call_operand.vmem [shape: f32[1,16], index: 6, kind: input, shape index: {}]
  %s7 = inlined_call_operand.hbm [shape: f32[16,16], index: 7, kind: output, shape index: {}]
  %s8 = sld [smem:[#allocation0]]
  $region69: #{controlnet_forward.1} parent=0
    _
  %s10 = ssub.s32 1, %s8
  %s11 = scalar_select 0, %s10, %s8
  $region1: #{controlnet_forward.1} parent=0
    #allocation2 [shape = 'u8[8192]{0}', space=vmem, size = 0x2000, scoped, tag = 'input window, operand 0']
    #allocation3 [shape = 's32[2]{0}', space=sflag, size = 0x8, scoped, tag = 'scoped memory for controlnet_forward.1']
    #allocation4 [shape = 's32[2]{0}', space=sflag, size = 0x8, scoped, tag = 'scoped memory for controlnet_forward.1']
    #allocation5 [shape = 'u8[8192]{0}', space=vmem, size = 0x2000, scoped, tag = 'input window, operand 1, single buffered']
    #allocation6 [shape = 's32[1]{0}', space=sflag, size = 0x4, scoped, tag = 'scoped memory for controlnet_forward.1']
    #allocation7 [shape = 'u8[8192]{0}', space=vmem, size = 0x2000, scoped, tag = 'output window, operand 0']
    %12 = vsyncpa [#allocation3], 0
    %s13 = scalar_lea.sflag [#allocation3], 1
    %14 = vsyncpa %s13, 0
    %15 = vsyncpa [#allocation6], 0
    %16 = vsyncpa [#allocation4], 0
    %s17 = scalar_lea.sflag [#allocation4], 1
    %18 = vsyncpa %s17, 0
    loop: start=0, step=1, limit=4
    $region2: #{controlnet_forward.1} parent=1 // loop_pre_header
      _
    $region3: #{controlnet_forward.1} parent=1 // loop_header
      %s20 = sphi 0, %s24
      %p21 = scmp.ge.s32.totalorder %s20, 4
      %s30 = sphi 0, %s32
      %s33 = sphi 0, %s30
      %s34 = sphi 0, %s33
      %s50 = sphi 0, %s34
      %s54 = sphi 0, %s54
      %s56 = sphi 0, %s54
      %s57 = sphi 0, %s56
      %s71 = sphi 0, %s57
      %s75 = sphi 0, %s75
      %s77 = sphi 0, %s75
      %s78 = sphi 0, %s77
      %s92 = sphi 0, %s78
      %s96 = sphi 0, %s96
      %s98 = sphi 0, %s96
      %s99 = sphi 0, %s98
      %s113 = sphi 0, %s99
      %s117 = sphi 0, %s117
      %s119 = sphi 0, %s117
      %s120 = sphi 0, %s119
      %s134 = sphi 0, %s120
      %s138 = sphi 0, %s138
      %s140 = sphi 0, %s138
      %s141 = sphi 0, %s140
      %s155 = sphi 0, %s141
      %s159 = sphi 0, %s159
      %s161 = sphi 0, %s159
      %s162 = sphi 0, %s161
      %s176 = sphi 0, %s162
      %s182 = sphi 0, %s184
      %s185 = sphi 0, %s182
      %s186 = sphi 0, %s185
      %s202 = sphi 0, %s186
    $region4: #{controlnet_forward.1} parent=1 // loop_header_branch
      %23 = sbr.rel (%p21) target = $region8
    $region5: #{controlnet_forward.1} parent=1 // loop_body
      %s25 = ssub.s32 %s20, 1
      %s26 = ssub.s32 %s20, 2
      %s27 = sadd.s32 %s20, 1
      %s28 = ssub.s32 %s20, %s27
      %p29 = scmp.eq.s32.totalorder %s28, 0
      %s31 = sadd.s32 %s30, 1
      %s32 = scalar_select %p29, %s30, %s31
      %p35 = pneg %p29
      %p36 = scmp.eq.s32.totalorder %s20, 1
      %p37 = por %p35, %p36
      %p38 = scmp.ne.s32.totalorder %s30, %s33
      %p39 = scmp.eq.s32.totalorder %s20, 0
      %p40 = por %p38, %p39
      %p41 = scmp.ne.s32.totalorder %s30, %s33
      %p42 = scmp.eq.s32.totalorder %s25, 1
      %p43 = por %p41, %p42
      %p44 = scmp.ne.s32.totalorder %s33, %s34
      %p45 = scmp.eq.s32.totalorder %s25, 0
      %p46 = por %p44, %p45
      %p47 = scmp.ne.s32.totalorder %s33, %s34
      %p48 = scmp.eq.s32.totalorder %s26, 1
      %p49 = por %p47, %p48
      %p51 = scmp.ne.s32.totalorder %s34, %s50
      %p52 = scmp.eq.s32.totalorder %s26, 0
      %p53 = por %p51, %p52
      %s55 = sadd.s32 %s54, 1
      %p58 = scmp.eq.s32.totalorder %s20, 1
      %p59 = scmp.ne.s32.totalorder %s54, %s56
      %p60 = scmp.eq.s32.totalorder %s20, 0
      %p61 = por %p59, %p60
      %p62 = scmp.ne.s32.totalorder %s54, %s56
      %p63 = scmp.eq.s32.totalorder %s25, 1
      %p64 = por %p62, %p63
      %p65 = scmp.ne.s32.totalorder %s56, %s57
      %p66 = scmp.eq.s32.totalorder %s25, 0
      %p67 = por %p65, %p66
      %p68 = scmp.ne.s32.totalorder %s56, %s57
      %p69 = scmp.eq.s32.totalorder %s26, 1
      %p70 = por %p68, %p69
      %p72 = scmp.ne.s32.totalorder %s57, %s71
      %p73 = scmp.eq.s32.totalorder %s26, 0
      %p74 = por %p72, %p73
      %s76 = sadd.s32 %s75, 1
      %p79 = scmp.eq.s32.totalorder %s20, 1
      %p80 = scmp.ne.s32.totalorder %s75, %s77
      %p81 = scmp.eq.s32.totalorder %s20, 0
      %p82 = por %p80, %p81
      %p83 = scmp.ne.s32.totalorder %s75, %s77
      %p84 = scmp.eq.s32.totalorder %s25, 1
      %p85 = por %p83, %p84
      %p86 = scmp.ne.s32.totalorder %s77, %s78
      %p87 = scmp.eq.s32.totalorder %s25, 0
      %p88 = por %p86, %p87
      %p89 = scmp.ne.s32.totalorder %s77, %s78
      %p90 = scmp.eq.s32.totalorder %s26, 1
      %p91 = por %p89, %p90
      %p93 = scmp.ne.s32.totalorder %s78, %s92
      %p94 = scmp.eq.s32.totalorder %s26, 0
      %p95 = por %p93, %p94
      %s97 = sadd.s32 %s96, 1
      %p100 = scmp.eq.s32.totalorder %s20, 1
      %p101 = scmp.ne.s32.totalorder %s96, %s98
      %p102 = scmp.eq.s32.totalorder %s20, 0
      %p103 = por %p101, %p102
      %p104 = scmp.ne.s32.totalorder %s96, %s98
      %p105 = scmp.eq.s32.totalorder %s25, 1
      %p106 = por %p104, %p105
      %p107 = scmp.ne.s32.totalorder %s98, %s99
      %p108 = scmp.eq.s32.totalorder %s25, 0
      %p109 = por %p107, %p108
      %p110 = scmp.ne.s32.totalorder %s98, %s99
      %p111 = scmp.eq.s32.totalorder %s26, 1
      %p112 = por %p110, %p111
      %p114 = scmp.ne.s32.totalorder %s99, %s113
      %p115 = scmp.eq.s32.totalorder %s26, 0
      %p116 = por %p114, %p115
      %s118 = sadd.s32 %s117, 1
      %p121 = scmp.eq.s32.totalorder %s20, 1
      %p122 = scmp.ne.s32.totalorder %s117, %s119
      %p123 = scmp.eq.s32.totalorder %s20, 0
      %p124 = por %p122, %p123
      %p125 = scmp.ne.s32.totalorder %s117, %s119
      %p126 = scmp.eq.s32.totalorder %s25, 1
      %p127 = por %p125, %p126
      %p128 = scmp.ne.s32.totalorder %s119, %s120
      %p129 = scmp.eq.s32.totalorder %s25, 0
      %p130 = por %p128, %p129
      %p131 = scmp.ne.s32.totalorder %s119, %s120
      %p132 = scmp.eq.s32.totalorder %s26, 1
      %p133 = por %p131, %p132
      %p135 = scmp.ne.s32.totalorder %s120, %s134
      %p136 = scmp.eq.s32.totalorder %s26, 0
      %p137 = por %p135, %p136
      %s139 = sadd.s32 %s138, 1
      %p142 = scmp.eq.s32.totalorder %s20, 1
      %p143 = scmp.ne.s32.totalorder %s138, %s140
      %p144 = scmp.eq.s32.totalorder %s20, 0
      %p145 = por %p143, %p144
      %p146 = scmp.ne.s32.totalorder %s138, %s140
      %p147 = scmp.eq.s32.totalorder %s25, 1
      %p148 = por %p146, %p147
      %p149 = scmp.ne.s32.totalorder %s140, %s141
      %p150 = scmp.eq.s32.totalorder %s25, 0
      %p151 = por %p149, %p150
      %p152 = scmp.ne.s32.totalorder %s140, %s141
      %p153 = scmp.eq.s32.totalorder %s26, 1
      %p154 = por %p152, %p153
      %p156 = scmp.ne.s32.totalorder %s141, %s155
      %p157 = scmp.eq.s32.totalorder %s26, 0
      %p158 = por %p156, %p157
      %s160 = sadd.s32 %s159, 1
      %p163 = scmp.eq.s32.totalorder %s20, 1
      %p164 = scmp.ne.s32.totalorder %s159, %s161
      %p165 = scmp.eq.s32.totalorder %s20, 0
      %p166 = por %p164, %p165
      %p167 = scmp.ne.s32.totalorder %s159, %s161
      %p168 = scmp.eq.s32.totalorder %s25, 1
      %p169 = por %p167, %p168
      %p170 = scmp.ne.s32.totalorder %s161, %s162
      %p171 = scmp.eq.s32.totalorder %s25, 0
      %p172 = por %p170, %p171
      %p173 = scmp.ne.s32.totalorder %s161, %s162
      %p174 = scmp.eq.s32.totalorder %s26, 1
      %p175 = por %p173, %p174
      %p177 = scmp.ne.s32.totalorder %s162, %s176
      %p178 = scmp.eq.s32.totalorder %s26, 0
      %p179 = por %p177, %p178
      %s180 = ssub.s32 %s20, %s27
      %p181 = scmp.eq.s32.totalorder %s180, 0
      %s183 = sadd.s32 %s182, 1
      %s184 = scalar_select %p181, %s182, %s183
      %p187 = pneg %p181
      %p188 = scmp.eq.s32.totalorder %s20, 1
      %p189 = por %p187, %p188
      %p190 = scmp.ne.s32.totalorder %s182, %s185
      %p191 = scmp.eq.s32.totalorder %s20, 0
      %p192 = por %p190, %p191
      %p193 = scmp.ne.s32.totalorder %s182, %s185
      %p194 = scmp.eq.s32.totalorder %s25, 1
      %p195 = por %p193, %p194
      %p196 = scmp.ne.s32.totalorder %s185, %s186
      %p197 = scmp.eq.s32.totalorder %s25, 0
      %p198 = por %p196, %p197
      %p199 = scmp.ne.s32.totalorder %s185, %s186
      %p200 = scmp.eq.s32.totalorder %s26, 1
      %p201 = por %p199, %p200
      %p203 = scmp.ne.s32.totalorder %s186, %s202
      %p204 = scmp.eq.s32.totalorder %s26, 0
      %p205 = por %p203, %p204
      %p206 = scmp.le.s32.totalorder 1, %s20
      %p207 = scmp.lt.s32.totalorder %s20, 3
      %p208 = pnand %p206, %p207
      %p209 = pneg %p208
      // Predicated region
      $region9: #{controlnet_forward.1} parent=5 // pred_check
        _
      $region10: #{controlnet_forward.1} parent=5 // pred_check_branch
        %211 = sbr.rel (%p208) target = $region12
      $region11: #{controlnet_forward.1} parent=5 // pred_region
        %s212 = ssub.s32 %s20, 1
        // Predicated region
        $region13: #{controlnet_forward.1} parent=11 // pred_check
          %p213 = pneg %p67
        $region14: #{controlnet_forward.1} parent=11 // pred_check_branch
          %215 = sbr.rel (%p213) target = $region16
        $region15: #{controlnet_forward.1} parent=11 // pred_region
          %217 = vsyncadd [#allocation6], 0
          %s218 = sshll.u32 %s1, 4
          %s219 = int_to_ptr.hbm [resolvable:$true] %s218
          %s220 = sshll.u32 [#allocation5], 4
          %s221 = int_to_ptr.vmem [resolvable:$true] %s220
          %226 = dma.hbm_to_vmem [thread:$0]  %s219, 256, %s221, [#allocation6], 64, 64, 4
        $region16: #{controlnet_forward.1} parent=11 // pred_fallthru
          _
        // Predicated region
        $region17: #{controlnet_forward.1} parent=11 // pred_check
          %p227 = pneg %p88
        $region18: #{controlnet_forward.1} parent=11 // pred_check_branch
          %229 = sbr.rel (%p227) target = $region20
        $region19: #{controlnet_forward.1} parent=11 // pred_region
          _
        $region20: #{controlnet_forward.1} parent=11 // pred_fallthru
          _
        // Predicated region
        $region21: #{controlnet_forward.1} parent=11 // pred_check
          %p230 = pneg %p109
        $region22: #{controlnet_forward.1} parent=11 // pred_check_branch
          %232 = sbr.rel (%p230) target = $region24
        $region23: #{controlnet_forward.1} parent=11 // pred_region
          _
        $region24: #{controlnet_forward.1} parent=11 // pred_fallthru
          _
        // Predicated region
        $region25: #{controlnet_forward.1} parent=11 // pred_check
          %p233 = pneg %p130
        $region26: #{controlnet_forward.1} parent=11 // pred_check_branch
          %235 = sbr.rel (%p233) target = $region28
        $region27: #{controlnet_forward.1} parent=11 // pred_region
          _
        $region28: #{controlnet_forward.1} parent=11 // pred_fallthru
          _
        // Predicated region
        $region29: #{controlnet_forward.1} parent=11 // pred_check
          %p236 = pneg %p151
        $region30: #{controlnet_forward.1} parent=11 // pred_check_branch
          %238 = sbr.rel (%p236) target = $region32
        $region31: #{controlnet_forward.1} parent=11 // pred_region
          _
        $region32: #{controlnet_forward.1} parent=11 // pred_fallthru
          _
        // Predicated region
        $region33: #{controlnet_forward.1} parent=11 // pred_check
          %p239 = pneg %p172
        $region34: #{controlnet_forward.1} parent=11 // pred_check_branch
          %241 = sbr.rel (%p239) target = $region36
        $region35: #{controlnet_forward.1} parent=11 // pred_region
          _
        $region36: #{controlnet_forward.1} parent=11 // pred_fallthru
          _
      $region12: #{controlnet_forward.1} parent=5 // pred_fallthru
        _
      %p242 = scmp.lt.s32.totalorder %s20, 2
      // Predicated region
      $region37: #{controlnet_forward.1} parent=5 // pred_check
        %p243 = pneg %p242
      $region38: #{controlnet_forward.1} parent=5 // pred_check_branch
        %245 = sbr.rel (%p243) target = $region40
      $region39: #{controlnet_forward.1} parent=5 // pred_region
        // Predicated region
        $region41: #{controlnet_forward.1} parent=39 // pred_check
          %p246 = pneg %p40
        $region42: #{controlnet_forward.1} parent=39 // pred_check_branch
          %248 = sbr.rel (%p246) target = $region44
        $region43: #{controlnet_forward.1} parent=39 // pred_region
          %s249 = sand.u32 %s30, 1
          %s250 = scalar_lea.sflag [#allocation3], %s249
          %s251 = sand.u32 %s30, 1
          %s252 = smul.addr %s251, 8
          %s253 = scalar_lea.vmem [#allocation2], %s252
          %255 = vsyncadd %s250, 0
          %s256 = smul.addr %s20, 8
          %s257 = scalar_lea.hbm %s0, %s256
          %s259 = sshll.u32 %s257, 4
          %s260 = int_to_ptr.hbm [resolvable:$true] %s259
          %s261 = sshll.u32 %s253, 4
          %s262 = int_to_ptr.vmem [resolvable:$true] %s261
          %264 = dma.hbm_to_vmem [thread:$0]  %s260, 128, %s262, %s250
        $region44: #{controlnet_forward.1} parent=39 // pred_fallthru
          _
      $region40: #{controlnet_forward.1} parent=5 // pred_fallthru
        _
      %p265 = scmp.le.s32.totalorder 1, %s20
      %p266 = scmp.lt.s32.totalorder %s20, 3
      %p267 = pnand %p265, %p266
      %p268 = pneg %p267
      // Predicated region
      $region45: #{controlnet_forward.1} parent=5 // pred_check
        _
      $region46: #{controlnet_forward.1} parent=5 // pred_check_branch
        %270 = sbr.rel (%p267) target = $region48
      $region47: #{controlnet_forward.1} parent=5 // pred_region
        %s271 = ssub.s32 %s20, 1
        %s272 = sand.u32 %s33, 1
        %s273 = scalar_lea.sflag [#allocation3], %s272
        %s274 = sand.u32 %s33, 1
        %s275 = smul.addr %s274, 8
        %s276 = scalar_lea.vmem [#allocation2], %s275
        // Predicated region
        $region49: #{controlnet_forward.1} parent=47 // pred_check
          %p277 = pneg %p46
        $region50: #{controlnet_forward.1} parent=47 // pred_check_branch
          %279 = sbr.rel (%p277) target = $region52
        $region51: #{controlnet_forward.1} parent=47 // pred_region
          %281 = dma.done %s273, 128
        $region52: #{controlnet_forward.1} parent=47 // pred_fallthru
          _
        // Predicated region
        $region53: #{controlnet_forward.1} parent=47 // pred_check
          %p282 = pneg %p67
        $region54: #{controlnet_forward.1} parent=47 // pred_check_branch
          %284 = sbr.rel (%p282) target = $region56
        $region55: #{controlnet_forward.1} parent=47 // pred_region
          %286 = dma.done [#allocation6], 256
        $region56: #{controlnet_forward.1} parent=47 // pred_fallthru
          _
        %s287 = sand.u32 %s33, 1
        %s288 = scalar_lea.sflag [#allocation3], %s287
        %s289 = sand.u32 %s33, 1
        %s290 = smul.addr %s289, 8
        %s291 = scalar_lea.vmem [#allocation2], %s290
        %p292 = pneg %p46
        %p293 = pneg %p43
        %p294 = pneg %p67
        %p295 = pneg %p64
        %p296 = pneg %p88
        %p297 = pneg %p85
        %p298 = pneg %p109
        %p299 = pneg %p106
        %p300 = pneg %p130
        %p301 = pneg %p127
        %p302 = pneg %p151
        %p303 = pneg %p148
        %p304 = pneg %p172
        %p305 = pneg %p169
        %p306 = pneg %p198
        %p307 = pneg %p195
        %s308 = sand.u32 %s185, 1
        %s309 = scalar_lea.sflag [#allocation4], %s308
        %s310 = sand.u32 %s185, 1
        %s311 = smul.addr %s310, 8
        %s312 = scalar_lea.vmem [#allocation7], %s311
        %v314 = vld [vmem:[%s276] sm:$0xff]
        %v315 = vpack.c.bf16 %v314, %v314
        %v316 = vld [vmem:[#allocation5] sm:$0xf]
        %v317 = vld [vmem:[#allocation5 + $0x4] sm:$0xf]
        %v318 = vld [vmem:[#allocation5 + $0x8] sm:$0xf]
        %v319 = vld [vmem:[#allocation5 + $0xc] sm:$0xf]
        %v320 = vld [vmem:[%s2] sm:$0x1]
        %v322 = vperm.slane %v320, 0
        %v328 = vunpack.c.l.b16 %v316
        %v329 = vunpack.c.l.b16 %v317
        %v330 = vunpack.c.l.b16 %v318
        %v331 = vunpack.c.l.b16 %v319
        %v332 = vpack.c.b16 %v329, %v328
        %v333 = vpack.c.b16 %v331, %v330
        %vm336 = vcmask 261120
        %v338 = vsel %vm336, %v315, 0
        %340 = vmatpush.bf16.msra.mxu0 0
        %341 = vmatpush.bf16.msra.mxu0 0
        %342 = vmatpush.bf16.msra.mxu0 0
        %343 = vmatpush.bf16.msra.mxu0 0
        %344 = vmatpush.bf16.msra.mxu0 0
        %345 = vmatpush.bf16.msra.mxu0 0
        %346 = vmatpush.bf16.msra.mxu0 %v333
        %347 = vmatpush.bf16.msra.mxu0 %v332
        %348 = vmatmul.bf16.gmra.mxu0 %v338
        %v349 = vpop.f32.mrf.mxu0
        %v350 = vadd.f32 %v322, %v349
        %v351 = vpop.f32.mrf.mxu0
        %352 = vdwg.mxu0
        %v353 = vmax.f32 %v350, 0.0
        %v354 = vpack.c.bf16 %v353, %v353
        %v355 = vld [vmem:[%s3] sm:$0xf]
        %v356 = vld [vmem:[%s3 + $0x4] sm:$0xf]
        %v357 = vld [vmem:[%s3 + $0x8] sm:$0xf]
        %v358 = vld [vmem:[%s3 + $0xc] sm:$0xf]
        %v359 = vld [vmem:[%s3 + $0x10] sm:$0xf]
        %v360 = vld [vmem:[%s3 + $0x14] sm:$0xf]
        %v361 = vld [vmem:[%s3 + $0x18] sm:$0xf]
        %v362 = vld [vmem:[%s3 + $0x1c] sm:$0xf]
        %v363 = vld [vmem:[%s3 + $0x20] sm:$0xf]
        %v364 = vld [vmem:[%s3 + $0x24] sm:$0xf]
        %v365 = vld [vmem:[%s3 + $0x28] sm:$0xf]
        %v366 = vld [vmem:[%s3 + $0x2c] sm:$0xf]
        %v367 = vld [vmem:[%s3 + $0x30] sm:$0xf]
        %v368 = vld [vmem:[%s3 + $0x34] sm:$0xf]
        %v369 = vld [vmem:[%s3 + $0x38] sm:$0xf]
        %v370 = vld [vmem:[%s3 + $0x3c] sm:$0xf]
        %v371 = vld [vmem:[%s4] sm:$0x1]
        %v373 = vperm.slane %v371, 0
        %v391 = vunpack.c.l.b16 %v355
        %v392 = vunpack.c.l.b16 %v356
        %v393 = vunpack.c.l.b16 %v357
        %v394 = vunpack.c.l.b16 %v358
        %v395 = vunpack.c.l.b16 %v359
        %v396 = vunpack.c.l.b16 %v360
        %v397 = vunpack.c.l.b16 %v361
        %v398 = vunpack.c.l.b16 %v362
        %v399 = vunpack.c.l.b16 %v363
        %v400 = vunpack.c.l.b16 %v364
        %v401 = vunpack.c.l.b16 %v365
        %v402 = vunpack.c.l.b16 %v366
        %v403 = vunpack.c.l.b16 %v367
        %v404 = vunpack.c.l.b16 %v368
        %v405 = vunpack.c.l.b16 %v369
        %v406 = vunpack.c.l.b16 %v370
        %v407 = vpack.c.b16 %v392, %v391
        %v408 = vpack.c.b16 %v394, %v393
        %v409 = vpack.c.b16 %v396, %v395
        %v410 = vpack.c.b16 %v398, %v397
        %v411 = vpack.c.b16 %v400, %v399
        %v412 = vpack.c.b16 %v402, %v401
        %v413 = vpack.c.b16 %v404, %v403
        %v414 = vpack.c.b16 %v406, %v405
        %423 = vmatpush.bf16.msra.mxu0 %v414
        %424 = vmatpush.bf16.msra.mxu0 %v413
        %425 = vmatpush.bf16.msra.mxu0 %v412
        %426 = vmatpush.bf16.msra.mxu0 %v411
        %427 = vmatpush.bf16.msra.mxu0 %v410
        %428 = vmatpush.bf16.msra.mxu0 %v409
        %429 = vmatpush.bf16.msra.mxu0 %v408
        %430 = vmatpush.bf16.msra.mxu0 %v407
        %431 = vmatmul.bf16.gmra.mxu0 %v354
        %v432 = vpop.f32.mrf.mxu0
        %v433 = vadd.f32 %v373, %v432
        %v434 = vpop.f32.mrf.mxu0
        %435 = vdwg.mxu0
        %v436 = vmax.f32 %v433, 0.0
        %v437 = vpack.c.bf16 %v436, %v436
        %v438 = vld [vmem:[%s5] sm:$0xf]
        %v439 = vld [vmem:[%s5 + $0x4] sm:$0xf]
        %v440 = vld [vmem:[%s5 + $0x8] sm:$0xf]
        %v441 = vld [vmem:[%s5 + $0xc] sm:$0xf]
        %v442 = vld [vmem:[%s5 + $0x10] sm:$0xf]
        %v443 = vld [vmem:[%s5 + $0x14] sm:$0xf]
        %v444 = vld [vmem:[%s5 + $0x18] sm:$0xf]
        %v445 = vld [vmem:[%s5 + $0x1c] sm:$0xf]
        %v446 = vld [vmem:[%s5 + $0x20] sm:$0xf]
        %v447 = vld [vmem:[%s5 + $0x24] sm:$0xf]
        %v448 = vld [vmem:[%s5 + $0x28] sm:$0xf]
        %v449 = vld [vmem:[%s5 + $0x2c] sm:$0xf]
        %v450 = vld [vmem:[%s5 + $0x30] sm:$0xf]
        %v451 = vld [vmem:[%s5 + $0x34] sm:$0xf]
        %v452 = vld [vmem:[%s5 + $0x38] sm:$0xf]
        %v453 = vld [vmem:[%s5 + $0x3c] sm:$0xf]
        %v454 = vld [vmem:[%s6] sm:$0x1]
        %v456 = vperm.slane %v454, 0
        %v474 = vunpack.c.l.b16 %v438
        %v475 = vunpack.c.l.b16 %v439
        %v476 = vunpack.c.l.b16 %v440
        %v477 = vunpack.c.l.b16 %v441
        %v478 = vunpack.c.l.b16 %v442
        %v479 = vunpack.c.l.b16 %v443
        %v480 = vunpack.c.l.b16 %v444
        %v481 = vunpack.c.l.b16 %v445
        %v482 = vunpack.c.l.b16 %v446
        %v483 = vunpack.c.l.b16 %v447
        %v484 = vunpack.c.l.b16 %v448
        %v485 = vunpack.c.l.b16 %v449
        %v486 = vunpack.c.l.b16 %v450
        %v487 = vunpack.c.l.b16 %v451
        %v488 = vunpack.c.l.b16 %v452
        %v489 = vunpack.c.l.b16 %v453
        %v490 = vpack.c.b16 %v475, %v474
        %v491 = vpack.c.b16 %v477, %v476
        %v492 = vpack.c.b16 %v479, %v478
        %v493 = vpack.c.b16 %v481, %v480
        %v494 = vpack.c.b16 %v483, %v482
        %v495 = vpack.c.b16 %v485, %v484
        %v496 = vpack.c.b16 %v487, %v486
        %v497 = vpack.c.b16 %v489, %v488
        %506 = vmatpush.bf16.msra.mxu0 %v497
        %507 = vmatpush.bf16.msra.mxu0 %v496
        %508 = vmatpush.bf16.msra.mxu0 %v495
        %509 = vmatpush.bf16.msra.mxu0 %v494
        %510 = vmatpush.bf16.msra.mxu0 %v493
        %511 = vmatpush.bf16.msra.mxu0 %v492
        %512 = vmatpush.bf16.msra.mxu0 %v491
        %513 = vmatpush.bf16.msra.mxu0 %v490
        %514 = vmatmul.bf16.gmra.mxu0 %v437
        %v515 = vpop.f32.mrf.mxu0
        %v516 = vadd.f32 %v456, %v515
        %v517 = vpop.f32.mrf.mxu0
        %518 = vdwg.mxu0
        %vm519 = vcmask 130048
        %520 = vst.msk [vmem:[%s312] sm:$0xff] %vm519, %v516
        %s521 = sand.u32 %s185, 1
        %s522 = scalar_lea.sflag [#allocation4], %s521
        %s523 = sand.u32 %s185, 1
        %s524 = smul.addr %s523, 8
        %s525 = scalar_lea.vmem [#allocation7], %s524
        // Predicated region
        $region57: #{controlnet_forward.1} parent=47 // pred_check
          %p526 = pneg %p195
        $region58: #{controlnet_forward.1} parent=47 // pred_check_branch
          %528 = sbr.rel (%p526) target = $region60
        $region59: #{controlnet_forward.1} parent=47 // pred_region
          %530 = vsyncadd %s522, 0
          %s531 = smul.addr %s25, 8
          %s532 = scalar_lea.hbm %s7, %s531
          %s534 = sshll.u32 %s525, 4
          %s535 = int_to_ptr.vmem [resolvable:$true] %s534
          %s536 = sshll.u32 %s532, 4
          %s537 = int_to_ptr.hbm [resolvable:$true] %s536
          %539 = dma.vmem_to_hbm [thread:$0]  %s535, 128, %s537, %s522
        $region60: #{controlnet_forward.1} parent=47 // pred_fallthru
          _
      $region48: #{controlnet_forward.1} parent=5 // pred_fallthru
        _
      %p540 = scmp.le.s32.totalorder 2, %s20
      // Predicated region
      $region61: #{controlnet_forward.1} parent=5 // pred_check
        %p541 = pneg %p540
      $region62: #{controlnet_forward.1} parent=5 // pred_check_branch
        %543 = sbr.rel (%p541) target = $region64
      $region63: #{controlnet_forward.1} parent=5 // pred_region
        %s544 = ssub.s32 %s20, 2
        // Predicated region
        $region65: #{controlnet_forward.1} parent=63 // pred_check
          %p545 = pneg %p201
        $region66: #{controlnet_forward.1} parent=63 // pred_check_branch
          %547 = sbr.rel (%p545) target = $region68
        $region67: #{controlnet_forward.1} parent=63 // pred_region
          %s548 = sand.u32 %s186, 1
          %s549 = scalar_lea.sflag [#allocation4], %s548
          %s550 = sand.u32 %s186, 1
          %s551 = smul.addr %s550, 8
          %s552 = scalar_lea.vmem [#allocation7], %s551
          %554 = dma.done %s549, 128
        $region68: #{controlnet_forward.1} parent=63 // pred_fallthru
          _
      $region64: #{controlnet_forward.1} parent=5 // pred_fallthru
        _
    $region6: #{controlnet_forward.1} parent=1 // loop_footer
      %s24 = sadd.s32 1, %s20
    $region7: #{controlnet_forward.1} parent=1 // loop_footer_branch
      %19 = sbr.rel target = $region3
    $region8: #{controlnet_forward.1} parent=1 // loop_exit
      _
    %555 = vsyncpa [#allocation3], 1
    %s556 = scalar_lea.sflag [#allocation3], 1
    %557 = vsyncpa %s556, 1
    %558 = vsyncpa [#allocation6], 1
    %559 = vsyncpa [#allocation4], 1
    %s560 = scalar_lea.sflag [#allocation4], 1
    %561 = vsyncpa %s560, 1

</llo_original>
